<compile_context>
chip_gen: v7x
topology: tpu7x:2x2x1
jax: 0.10.0
libtpu: 0.0.40
codegen_flags: <defaults>
</compile_context>

<pallas_src>
import functools
import math

import jax
import jax.numpy as jnp
from jax import lax
from jax.experimental import pallas as pl
from jax.experimental.pallas import tpu as pltpu


def _bce_partial_kernel(p_ref, t_ref, out_ref, *, lane, block_rows, sub, steps,
                        total, needs_mask, binary_targets):
    """Per-(shard, step) partial BCE sums.

    grid = (n_shards, steps): the shard axis is independent (one (8, lane) output
    row-block per shard; split across TensorCores on v7x); the step axis carries the
    accumulation and stays 'arbitrary' and last.  out_ref's block index is constant
    along the step axis, so it is VMEM-resident across steps and doubles as the
    accumulator (no VMEM scratch, no epilogue copy).
    """
    s = pl.program_id(0)
    k = pl.program_id(1)

    @pl.when(k == 0)
    def _():
        out_ref[...] = jnp.zeros_like(out_ref)

    nsub = block_rows // sub

    if needs_mask:
        # Hoisted, loop-invariant iotas (JAX does not CSE broadcast_in_dim).
        ridx = lax.broadcasted_iota(jnp.int32, (sub, lane), 0)
        lidx = lax.broadcasted_iota(jnp.int32, (sub, lane), 1)
        last_row = total // lane        # Python closure constants
        tail = total % lane
        row0 = (s * steps + k) * block_rows   # first global row of this block
    else:
        ridx = lidx = None
        last_row = tail = 0
        row0 = 0

    def body(c, acc):
        r0 = pl.multiple_of(c * sub, sub)
        p = p_ref[pl.ds(r0, sub), :].astype(jnp.float32)
        t = t_ref[pl.ds(r0, sub), :].astype(jnp.float32)

        if needs_mask:
            grow = ridx + (row0 + r0)
            if tail:
                mask = (grow < last_row) | ((grow == last_row) & (lidx < tail))
            else:
                mask = grow < last_row
            # Keep masked lanes finite before the logs; contributions zeroed below.
            p = jnp.where(mask, p, jnp.float32(0.5))
            t = jnp.where(mask, t, jnp.float32(0.5))

        if binary_targets:
            # Hard 0/1 labels: one transcendental per element (the select is free VPU).
            loss = -jnp.maximum(
                jnp.log(jnp.where(t >= 0.5, p, 1.0 - p)), jnp.float32(-100.0))
        else:
            # PyTorch BCELoss clamps both log terms at -100 for numerical stability.
            log_p = jnp.maximum(jnp.log(p), jnp.float32(-100.0))
            log_1mp = jnp.maximum(jnp.log(1.0 - p), jnp.float32(-100.0))
            loss = -(t * log_p + (1.0 - t) * log_1mp)

        if needs_mask:
            loss = jnp.where(mask, loss, jnp.float32(0.0))

        # Sublane-group fold: (sub, lane) -> (sub//8, 8, lane) keeps the (8,128) vreg
        # tiling intact; the leading-axis sum is pure vreg-wise VPU adds (no XLU).
        return acc + loss.reshape(sub // 8, 8, lane).sum(axis=0)

    acc = lax.fori_loop(0, nsub, body, jnp.zeros((8, lane), jnp.float32),
                        unroll=min(nsub, 8))
    out_ref[...] += acc


def _round_up(x, m):
    return ((x + m - 1) // m) * m


def _num_tensorcores():
    """Best-effort TensorCores-per-chip detection (2 on v7x, 1 on v5e/v6e)."""
    try:
        d = jax.local_devices()[0]
        kind = (getattr(d, "device_kind", "") or "").lower()
        if "v7" in kind:
            return 2
        return int(getattr(d, "num_cores", 1) or 1)
    except Exception:
        return 1


_TARGET_BLOCK_ELEMS = 2 * 1024 * 1024   # ~8 MiB f32 / 4 MiB bf16 per input block
_SUB_ELEMS = 16 * 1024                  # inner sub-slab size (~16 f32 vregs/operand)


def bce_loss(pred, target, *, binary_targets=False):
    """Mean BCE over all elements == nn.BCELoss(weight=None, size_average=True)."""
    assert pred.shape == target.shape
    total = int(math.prod(pred.shape))
    p = pred.reshape(-1)
    t = target.reshape(-1)

    # ---- lane selection: pick a lane width whose 8*lane divides `total` so NO padding
    # copy is needed (the common case); ragged tails are masked in-kernel otherwise.
    lane = None
    for cand in (2048, 1024, 512, 256, 128):
        if total % (8 * cand) == 0:
            lane = cand
            break
    if lane is None:
        # Genuinely ragged size: pad the flat tail (< 1024 elements) once; values are
        # irrelevant because the kernel masks by true element index.
        # TODO(synk): a manual-DMA tail path could remove this extra HBM pass for
        # very large ragged inputs.
        lane = 128
        padded = _round_up(total, 8 * lane)
        p = jnp.pad(p, (0, padded - total), constant_values=0.5)
        t = jnp.pad(t, (0, padded - total), constant_values=0.5)
    else:
        padded = total
    rows = padded // lane                          # multiple of 8 by construction

    # ---- block sizing: big (~8 MiB f32) blocks amortize the ~0.35 us/step overhead;
    # small inputs run as a single block (no grid-step overhead).
    sub = max(8, _SUB_ELEMS // lane)
    if rows * lane <= _TARGET_BLOCK_ELEMS:
        block_rows = rows
    else:
        block_rows = max(sub, (_TARGET_BLOCK_ELEMS // lane) // sub * sub)
    if block_rows % sub != 0:
        sub = 8                                    # block_rows is always a multiple of 8

    nblocks = pl.cdiv(rows, block_rows)
    if nblocks >= 2 and nblocks % 2 == 0:
        n_shards, steps = 2, nblocks // 2          # 2-way split (real 2-TC split on v7x)
    else:
        n_shards, steps = 1, nblocks
    # Mask whenever grid coverage exceeds the true element count (ragged pad or the
    # partially-overhanging last block).
    needs_mask = (nblocks * block_rows * lane) != total

    p2 = p.reshape(rows, lane)
    t2 = t.reshape(rows, lane)

    kernel = functools.partial(
        _bce_partial_kernel,
        lane=lane, block_rows=block_rows, sub=sub, steps=steps,
        total=total, needs_mask=needs_mask, binary_targets=binary_targets)

    # Shard axis: CORE_PARALLEL guarantees the 2-TensorCore split on v7x; on 1-TC
    # chips (v5e/v6e) fall back to PARALLEL (there it is just loop ordering).
    shard_sem = (pltpu.CORE_PARALLEL
                 if (n_shards > 1 and _num_tensorcores() >= n_shards)
                 else pltpu.PARALLEL)

    itemsize = jnp.dtype(pred.dtype).itemsize
    cost = pl.CostEstimate(
        flops=8 * total,
        transcendentals=(1 if binary_targets else 2) * total,
        bytes_accessed=2 * total * itemsize + n_shards * 8 * lane * 4,
    )

    partials = pl.pallas_call(
        kernel,
        out_shape=jax.ShapeDtypeStruct((n_shards * 8, lane), jnp.float32),
        grid_spec=pltpu.PrefetchScalarGridSpec(
            num_scalar_prefetch=0,
            grid=(n_shards, steps),
            in_specs=[
                pl.BlockSpec((block_rows, lane), lambda s, k: (s * steps + k, 0)),
                pl.BlockSpec((block_rows, lane), lambda s, k: (s * steps + k, 0)),
            ],
            out_specs=pl.BlockSpec((8, lane), lambda s, k: (s, 0)),
        ),
        compiler_params=pltpu.CompilerParams(
            dimension_semantics=(shard_sem, pltpu.ARBITRARY),
            # 2 inputs x 2 buffers x ~8 MiB blocks ~= 32 MiB working set; fits v7x's
            # 64 MiB physical VMEM; v5e's 16 MiB scoped default would otherwise OOM.
            vmem_limit_bytes=48 * 1024 * 1024,
        ),
        cost_estimate=cost,
    )(p2, t2)

    # One tiny final cross-lane reduce + divide on the (n_shards*8, lane) partials.
    return jnp.sum(partials) / jnp.float32(total)


def _reference(pred, target):
    p = pred.reshape(-1).astype(jnp.float32)
    t = target.reshape(-1).astype(jnp.float32)
    return jnp.mean(
        -(t * jnp.maximum(jnp.log(p), -100.0)
          + (1.0 - t) * jnp.maximum(jnp.log(1.0 - p), -100.0)))


if __name__ == "__main__":
    key = jax.random.PRNGKey(0)
    k1, k2, k3, k4, k5, k6 = jax.random.split(key, 6)

    # NCHW shapes consistent with the module's usage.
    B, C, H, W = 2, 4, 16, 16
    pred = jax.nn.sigmoid(jax.random.normal(k1, (B, C, H, W), dtype=jnp.float32))
    target = (jax.random.uniform(k2, (B, C, H, W)) > 0.5).astype(jnp.float32)
    loss = jax.block_until_ready(bce_loss(pred, target))
    ref = _reference(pred, target)
    assert jnp.allclose(loss, ref, rtol=1e-5, atol=1e-6), (loss, ref)

    # Odd (non-multiple-of-128) size with soft targets: exercises the ragged/masked path.
    pred2 = jax.nn.sigmoid(jax.random.normal(k3, (2, 3, 17, 19), dtype=jnp.float32))
    target2 = jax.random.uniform(k4, (2, 3, 17, 19), dtype=jnp.float32)
    loss2 = jax.block_until_ready(bce_loss(pred2, target2))
    ref2 = _reference(pred2, target2)
    assert jnp.allclose(loss2, ref2, rtol=1e-5, atol=1e-6), (loss2, ref2)

    # bf16 inputs: kept narrow over HBM, cast to f32 in-kernel.
    pred3 = jax.nn.sigmoid(
        jax.random.normal(k5, (2, 4, 32, 32), dtype=jnp.float32)).astype(jnp.bfloat16)
    target3 = (jax.random.uniform(k6, (2, 4, 32, 32)) > 0.5).astype(jnp.bfloat16)
    loss3 = jax.block_until_ready(bce_loss(pred3, target3))
    ref3 = _reference(pred3, target3)
    assert jnp.allclose(loss3, ref3, rtol=1e-4, atol=1e-5), (loss3, ref3)

    print("KERNEL_OK")
</pallas_src>

<mosaic_0001>
module attributes {stable_mosaic.version = 11 : i64} {
  func.func @_bce_partial_kernel(%arg0: i32, %arg1: i32, %arg2: memref<8x256xf32, #tpu.memory_space<vmem>>, %arg3: memref<8x256xf32, #tpu.memory_space<vmem>>, %arg4: memref<8x256xf32, #tpu.memory_space<vmem>>) attributes {dimension_semantics = [#tpu.dimension_semantics<parallel>, #tpu.dimension_semantics<arbitrary>], iteration_bounds = array<i64: 1, 1>, scalar_prefetch = 0 : i64, scratch_operands = 0 : i64, tpu.core_type = #tpu.core_type<tc>, window_params = [{transform_indices = @transform_0, window_bounds = array<i64: 8, 256>}, {transform_indices = @transform_1, window_bounds = array<i64: 8, 256>}, {transform_indices = @transform_2, window_bounds = array<i64: 8, 256>}]} {
    %c0_i32 = arith.constant 0 : i32
    %0 = arith.cmpi eq, %arg1, %c0_i32 : i32
    %1 = arith.extui %0 : i1 to i32
    %c0_i32_0 = arith.constant 0 : i32
    %2 = arith.cmpi ne, %1, %c0_i32_0 : i32
    scf.if %2 {
      %cst_13 = arith.constant 0.000000e+00 : f32
      %31 = vector.broadcast %cst_13 : f32 to vector<8x256xf32>
      %c0_14 = arith.constant 0 : index
      %c0_15 = arith.constant 0 : index
      %32 = vector.load %arg4[%c0_14, %c0_15] : memref<8x256xf32, #tpu.memory_space<vmem>>, vector<8x256xf32>
      tpu.vector_store %arg4[%c0_14, %c0_15], %31 {strides = array<i32>} : memref<8x256xf32, #tpu.memory_space<vmem>>, vector<8x256xf32>,
    } else {
    }
    %cst = arith.constant 0.000000e+00 : f32
    %3 = vector.broadcast %cst : f32 to vector<8x256xf32>
    %c0_i32_1 = arith.constant 0 : i32
    %c8_i32 = arith.constant 8 : i32
    %4 = arith.muli %c0_i32_1, %c8_i32 : i32
    %5 = tpu.assume_multiple %4, 8 : i32
    %6 = arith.index_cast %5 : i32 to index
    %c0 = arith.constant 0 : index
    %7 = vector.load %arg2[%6, %c0] : memref<8x256xf32, #tpu.memory_space<vmem>>, vector<8x256xf32>
    %8 = arith.index_cast %5 : i32 to index
    %c0_2 = arith.constant 0 : index
    %9 = vector.load %arg3[%8, %c0_2] : memref<8x256xf32, #tpu.memory_space<vmem>>, vector<8x256xf32>
    %10 = math.log %7 : vector<8x256xf32>
    %cst_3 = arith.constant -1.000000e+02 : f32
    %11 = vector.broadcast %cst_3 : f32 to vector<8x256xf32>
    %12 = arith.maximumf %10, %11 : vector<8x256xf32>
    %cst_4 = arith.constant 1.000000e+00 : f32
    %13 = vector.broadcast %cst_4 : f32 to vector<8x256xf32>
    %14 = arith.subf %13, %7 : vector<8x256xf32>
    %15 = math.log %14 : vector<8x256xf32>
    %cst_5 = arith.constant -1.000000e+02 : f32
    %16 = vector.broadcast %cst_5 : f32 to vector<8x256xf32>
    %17 = arith.maximumf %15, %16 : vector<8x256xf32>
    %18 = arith.mulf %9, %12 : vector<8x256xf32>
    %cst_6 = arith.constant 1.000000e+00 : f32
    %19 = vector.broadcast %cst_6 : f32 to vector<8x256xf32>
    %20 = arith.subf %19, %9 : vector<8x256xf32>
    %21 = arith.mulf %20, %17 : vector<8x256xf32>
    %22 = arith.addf %18, %21 : vector<8x256xf32>
    %cst_7 = arith.constant 0.000000e+00 : f32
    %23 = vector.broadcast %cst_7 : f32 to vector<8x256xf32>
    %24 = arith.subf %23, %22 : vector<8x256xf32>
    %25 = vector.shape_cast %24 : vector<8x256xf32> to vector<1x8x256xf32>
    %cst_8 = arith.constant dense<0.000000e+00> : vector<8x256xf32>
    %26 = vector.multi_reduction <add>, %25, %cst_8 [0] : vector<1x8x256xf32> to vector<8x256xf32>
    %27 = arith.addf %3, %26 : vector<8x256xf32>
    %c1_i32 = arith.constant 1 : i32
    %c0_9 = arith.constant 0 : index
    %c0_10 = arith.constant 0 : index
    %28 = vector.load %arg4[%c0_9, %c0_10] : memref<8x256xf32, #tpu.memory_space<vmem>>, vector<8x256xf32>
    %29 = arith.addf %28, %27 : vector<8x256xf32>
    %c0_11 = arith.constant 0 : index
    %c0_12 = arith.constant 0 : index
    %30 = vector.load %arg4[%c0_11, %c0_12] : memref<8x256xf32, #tpu.memory_space<vmem>>, vector<8x256xf32>
    tpu.vector_store %arg4[%c0_11, %c0_12], %29 {strides = array<i32>} : memref<8x256xf32, #tpu.memory_space<vmem>>, vector<8x256xf32>,
    return
  }
  func.func @transform_0(%arg0: i32, %arg1: i32) -> (i32, i32) {
    %c1_i32 = arith.constant 1 : i32
    %0 = arith.muli %arg0, %c1_i32 : i32
    %1 = arith.addi %0, %arg1 : i32
    %c0_i32 = arith.constant 0 : i32
    %c0_i32_0 = arith.constant 0 : i32
    return %1, %c0_i32 : i32, i32
  }
  func.func @transform_1(%arg0: i32, %arg1: i32) -> (i32, i32) {
    %c1_i32 = arith.constant 1 : i32
    %0 = arith.muli %arg0, %c1_i32 : i32
    %1 = arith.addi %0, %arg1 : i32
    %c0_i32 = arith.constant 0 : i32
    %c0_i32_0 = arith.constant 0 : i32
    return %1, %c0_i32 : i32, i32
  }
  func.func @transform_2(%arg0: i32, %arg1: i32) -> (i32, i32) {
    %c0_i32 = arith.constant 0 : i32
    %c0_i32_0 = arith.constant 0 : i32
    return %arg0, %c0_i32 : i32, i32
  }
}

</mosaic_0001>

<llo_original>
// kernel: tpu_custom_call.1
$region0: #{tpu_custom_call.1}
  #allocation0 [shape = 'u32[]', space=smem, size = 0x4, offset = 0x4, fixed_abs, tag = 'smem constant byte address 0x4 - core index']
  #allocation1 [shape = 'u32[144,128]{1,0:T(1,128)}', space=vmem, size = 0x12000, scoped, tag = 'internal scratch']
  %s0 = inlined_call_operand.hbm [shape: f32[8,256], index: 0, kind: input, shape index: {}]
  %s1 = inlined_call_operand.hbm [shape: f32[8,256], index: 1, kind: input, shape index: {}]
  %s2 = inlined_call_operand.hbm [shape: f32[8,256], index: 2, kind: output, shape index: {}]
  %s3 = sld [smem:[#allocation0]]
  $region30: #{tpu_custom_call.1} parent=0
    _
  %s5 = ssub.s32 1, %s3
  %s6 = scalar_select 0, %s5, %s3
  $region1: #{tpu_custom_call.1} parent=0
    #allocation2 [shape = 'u8[8192]{0}', space=vmem, size = 0x2000, scoped, tag = 'input window, operand 0, single buffered']
    #allocation3 [shape = 's32[1]{0}', space=sflag, size = 0x4, scoped, tag = 'scoped memory for tpu_custom_call.1']
    #allocation4 [shape = 's32[1]{0}', space=sflag, size = 0x4, scoped, tag = 'scoped memory for tpu_custom_call.1']
    #allocation5 [shape = 'u8[8192]{0}', space=vmem, size = 0x2000, scoped, tag = 'input window, operand 1, single buffered']
    #allocation6 [shape = 's32[1]{0}', space=sflag, size = 0x4, scoped, tag = 'scoped memory for tpu_custom_call.1']
    #allocation7 [shape = 'u8[8192]{0}', space=vmem, size = 0x2000, scoped, tag = 'output window, operand 0, single buffered']
    %7 = vsyncpa [#allocation3], 0
    %8 = vsyncpa [#allocation6], 0
    %9 = vsyncpa [#allocation4], 0
    // Predicated region
    $region2: #{tpu_custom_call.1} parent=1 // pred_check
      _
    $region3: #{tpu_custom_call.1} parent=1 // pred_check_branch
      %11 = sbr.rel (0) target = $region5
    $region4: #{tpu_custom_call.1} parent=1 // pred_region
      %s12 = sadd.s32 0, 0
      %s14 = ssub.s32 256, 256
      %15 = vsyncadd [#allocation3], %s14
      %s16 = smul.addr %s12, 2
      %s17 = smul.addr %s16, 128
      %s18 = scalar_lea.hbm %s0, %s17
      %s20 = sshll.u32 [#allocation2], 4
      %s21 = int_to_ptr.vmem [resolvable:$true] %s20
      %23 = dma.hbm_to_vmem [thread:$0]  %s18, 256, %s21, [#allocation3]
    $region5: #{tpu_custom_call.1} parent=1 // pred_fallthru
      _
    // Predicated region
    $region6: #{tpu_custom_call.1} parent=1 // pred_check
      _
    $region7: #{tpu_custom_call.1} parent=1 // pred_check_branch
      %25 = sbr.rel (0) target = $region9
    $region8: #{tpu_custom_call.1} parent=1 // pred_region
      %s26 = sadd.s32 0, 0
      %s28 = ssub.s32 256, 256
      %29 = vsyncadd [#allocation6], %s28
      %s30 = smul.addr %s26, 2
      %s31 = smul.addr %s30, 128
      %s32 = scalar_lea.hbm %s1, %s31
      %s34 = sshll.u32 [#allocation5], 4
      %s35 = int_to_ptr.vmem [resolvable:$true] %s34
      %37 = dma.hbm_to_vmem [thread:$0]  %s32, 256, %s35, [#allocation6]
    $region9: #{tpu_custom_call.1} parent=1 // pred_fallthru
      _
    // Predicated region
    $region10: #{tpu_custom_call.1} parent=1 // pred_check
      _
    $region11: #{tpu_custom_call.1} parent=1 // pred_check_branch
      %39 = sbr.rel (0) target = $region13
    $region12: #{tpu_custom_call.1} parent=1 // pred_region
      %40 = dma.done [#allocation3], 256
    $region13: #{tpu_custom_call.1} parent=1 // pred_fallthru
      _
    // Predicated region
    $region14: #{tpu_custom_call.1} parent=1 // pred_check
      _
    $region15: #{tpu_custom_call.1} parent=1 // pred_check_branch
      %42 = sbr.rel (0) target = $region17
    $region16: #{tpu_custom_call.1} parent=1 // pred_region
      %43 = dma.done [#allocation6], 256
    $region17: #{tpu_custom_call.1} parent=1 // pred_fallthru
      _
    %s44 = sadd.s32 0, 0
    %s45 = sadd.s32 0, 0
    %p46 = scmp.eq.s32.totalorder 0, 0
    // Predicated region
    $region18: #{tpu_custom_call.1} parent=1 // pred_check
      %p47 = pneg %p46
    $region19: #{tpu_custom_call.1} parent=1 // pred_check_branch
      %49 = sbr.rel (%p47) target = $region21
    $region20: #{tpu_custom_call.1} parent=1 // pred_region
      %50 = vst [vmem:[#allocation7] sm:$0xff] 0.0
      %51 = vst [vmem:[#allocation7 + $0x8] sm:$0xff] 0.0
    $region21: #{tpu_custom_call.1} parent=1 // pred_fallthru
      _
    %s52 = smul.u32 0, 2
    %s53 = smul.addr %s52, 8
    %s54 = scalar_lea.vmem [#allocation2], %s53
    %v55 = vld [vmem:[%s54] sm:$0xff]
    %v56 = vld [vmem:[%s54 + $0x8] sm:$0xff]
    %s57 = smul.addr %s52, 8
    %s58 = scalar_lea.vmem [#allocation5], %s57
    %v59 = vld [vmem:[%s58] sm:$0xff]
    %v60 = vld [vmem:[%s58 + $0x8] sm:$0xff]
    %v61 = vlog2.pop %v55
    %v62 = vmul.f32 %v61, 0.6931472
    %v63 = vlog2.pop %v56
    %v64 = vmul.f32 %v63, 0.6931472
    %v65 = vmax.f32 %v62, -100.0
    %v66 = vmax.f32 %v64, -100.0
    %v67 = vsub.f32 1.0, %v55
    %v68 = vsub.f32 1.0, %v56
    %v69 = vlog2.pop %v67
    %v70 = vmul.f32 %v69, 0.6931472
    %v71 = vlog2.pop %v68
    %v72 = vmul.f32 %v71, 0.6931472
    %v73 = vmax.f32 %v70, -100.0
    %v74 = vmax.f32 %v72, -100.0
    %v75 = vmul.f32 %v59, %v65
    %v76 = vmul.f32 %v60, %v66
    %v77 = vsub.f32 1.0, %v59
    %v78 = vsub.f32 1.0, %v60
    %v79 = vmul.f32 %v77, %v73
    %v80 = vmul.f32 %v78, %v74
    %v81 = vadd.f32 %v75, %v79
    %v82 = vadd.f32 %v76, %v80
    %v83 = vsub.f32 0.0, %v81
    %v84 = vsub.f32 0.0, %v82
    %v85 = vadd.f32 %v83, 0.0
    %v86 = vadd.f32 %v84, 0.0
    %v87 = vadd.f32 %v85, 0.0
    %v88 = vadd.f32 %v86, 0.0
    %v89 = vld [vmem:[#allocation7] sm:$0xff]
    %v90 = vld [vmem:[#allocation7 + $0x8] sm:$0xff]
    %v91 = vadd.f32 %v89, %v87
    %v92 = vadd.f32 %v90, %v88
    %93 = vst [vmem:[#allocation7] sm:$0xff] %v91
    %94 = vst [vmem:[#allocation7 + $0x8] sm:$0xff] %v92
    // Predicated region
    $region22: #{tpu_custom_call.1} parent=1 // pred_check
      _
    $region23: #{tpu_custom_call.1} parent=1 // pred_check_branch
      %96 = sbr.rel (0) target = $region25
    $region24: #{tpu_custom_call.1} parent=1 // pred_region
      %s98 = ssub.s32 256, 256
      %99 = vsyncadd [#allocation4], %s98
      %s101 = sshll.u32 [#allocation7], 4
      %s102 = int_to_ptr.vmem [resolvable:$true] %s101
      %104 = dma.vmem_to_hbm [thread:$0]  %s102, 256, %s2, [#allocation4]
    $region25: #{tpu_custom_call.1} parent=1 // pred_fallthru
      _
    // Predicated region
    $region26: #{tpu_custom_call.1} parent=1 // pred_check
      _
    $region27: #{tpu_custom_call.1} parent=1 // pred_check_branch
      %106 = sbr.rel (0) target = $region29
    $region28: #{tpu_custom_call.1} parent=1 // pred_region
      %107 = dma.done [#allocation4], 256
    $region29: #{tpu_custom_call.1} parent=1 // pred_fallthru
      _
    %108 = vsyncpa [#allocation3], 1
    %109 = vsyncpa [#allocation6], 1
    %110 = vsyncpa [#allocation4], 1

</llo_original>
